<compile_context>
chip_gen: v5e
topology: v5e:2x2
jax: 0.10.0
libtpu: 0.0.40
codegen_flags: <defaults>
</compile_context>

<pallas_src>
import jax
import jax.numpy as jnp
from jax.experimental import pallas as pl
from jax.experimental.pallas import tpu as pltpu

_LANES = 128          # vreg lane width
_BLOCK_ROWS = 2048    # 2048 x 128 f32 = 1 MiB per buffer; <= ~1 MiB guidance
                      # for v5e, and fits v7x's smaller VMEM with headroom.


def _zero_mul_kernel(x_ref, o_ref):
    # Elementwise multiply by zero on the VPU: preserves torch.mul(x, 0)
    # numerics (NaN/Inf -> NaN, negative finite -> -0.0), same dtype.
    o_ref[...] = x_ref[...] * jnp.zeros((), dtype=x_ref.dtype)


def zero_forward(x, stride, *, block_rows=_BLOCK_ROWS):
    # TODO(synk): the ::stride spatial gather is indexing glue in plain JAX;
    # allow_input_fusion asks XLA to fuse it into the kernel's input DMA so
    # x_sub is not written back to HBM as a separate pass.
    x_sub = x[:, :, ::stride, ::stride]          # (N, C, ceil(H/s), ceil(W/s))
    out_shape4d = x_sub.shape
    total = x_sub.size

    # Flatten to a lane-dense 2-D slab (rows, 128) so stores are unmasked.
    rows = pl.cdiv(total, _LANES)
    pad = rows * _LANES - total
    flat = x_sub.reshape(-1)
    if pad:
        flat = jnp.pad(flat, (0, pad))
    x2d = flat.reshape(rows, _LANES)

    # Tile rows into fixed-size blocks.  A block either spans the full row
    # extent (allowed by the (8,128) rule) or is a multiple of 8 sublanes.
    br = rows if rows <= block_rows else block_rows
    grid = (pl.cdiv(rows, br),)

    out2d = pl.pallas_call(
        _zero_mul_kernel,
        out_shape=jax.ShapeDtypeStruct((rows, _LANES), x2d.dtype),
        grid=grid,
        in_specs=[pl.BlockSpec((br, _LANES), lambda i: (i, 0))],
        out_specs=pl.BlockSpec((br, _LANES), lambda i: (i, 0)),
        compiler_params=pltpu.CompilerParams(
            dimension_semantics=("parallel",),
            allow_input_fusion=[True],
        ),
    )(x2d)

    out_flat = out2d.reshape(-1)
    if pad:
        out_flat = out_flat[:total]
    return out_flat.reshape(out_shape4d)


if __name__ == "__main__":
    key = jax.random.PRNGKey(0)
    x = jax.random.normal(key, (2, 4, 16, 16), dtype=jnp.float32)
    # Inject NaN / Inf at positions that survive the ::2 subsample so the
    # torch.mul(x, 0) propagation semantics are exercised.
    x = x.at[0, 0, 0, 0].set(jnp.nan)
    x = x.at[1, 2, 4, 6].set(jnp.inf)
    stride = 2

    out = zero_forward(x, stride)
    out = jax.block_until_ready(out)

    # Reference: torch.mul(x[:, :, ::stride, ::stride], 0)
    ref = x[:, :, ::stride, ::stride] * jnp.zeros((), x.dtype)
    assert out.shape == ref.shape == (2, 4, 8, 8), out.shape
    assert out.dtype == x.dtype
    nan_match = jnp.isnan(out) == jnp.isnan(ref)
    val_match = jnp.where(jnp.isnan(ref), True, out == ref)
    assert bool(jnp.all(nan_match & val_match))

    print("KERNEL_OK")
</pallas_src>

<mosaic_0001>
module attributes {stable_mosaic.version = 11 : i64} {
  func.func @_zero_mul_kernel(%arg0: i32, %arg1: memref<4x128xf32, #tpu.memory_space<vmem>>, %arg2: memref<4x128xf32, #tpu.memory_space<vmem>>) attributes {dimension_semantics = [#tpu.dimension_semantics<parallel>], iteration_bounds = array<i64: 1>, scalar_prefetch = 0 : i64, scratch_operands = 0 : i64, tpu.core_type = #tpu.core_type<tc>, window_params = [{transform_indices = @transform_0, window_bounds = array<i64: 4, 128>}, {transform_indices = @transform_1, window_bounds = array<i64: 4, 128>}]} {
    %c0 = arith.constant 0 : index
    %c0_0 = arith.constant 0 : index
    %0 = vector.load %arg1[%c0, %c0_0] : memref<4x128xf32, #tpu.memory_space<vmem>>, vector<4x128xf32>
    %cst = arith.constant 0.000000e+00 : f32
    %1 = vector.broadcast %cst : f32 to vector<4x128xf32>
    %2 = arith.mulf %0, %1 : vector<4x128xf32>
    %c0_1 = arith.constant 0 : index
    %c0_2 = arith.constant 0 : index
    %3 = vector.load %arg2[%c0_1, %c0_2] : memref<4x128xf32, #tpu.memory_space<vmem>>, vector<4x128xf32>
    tpu.vector_store %arg2[%c0_1, %c0_2], %2 {strides = array<i32>} : memref<4x128xf32, #tpu.memory_space<vmem>>, vector<4x128xf32>,
    return
  }
  func.func @transform_0(%arg0: i32) -> (i32, i32) {
    %c0_i32 = arith.constant 0 : i32
    %c0_i32_0 = arith.constant 0 : i32
    return %arg0, %c0_i32 : i32, i32
  }
  func.func @transform_1(%arg0: i32) -> (i32, i32) {
    %c0_i32 = arith.constant 0 : i32
    %c0_i32_0 = arith.constant 0 : i32
    return %arg0, %c0_i32 : i32, i32
  }
}

</mosaic_0001>

<llo_original>
// kernel: tpu_custom_call.1
$region0: #{tpu_custom_call.1}
  #allocation0 [shape = 'u32[]', space=smem, size = 0x4, offset = 0x4, fixed_abs, tag = 'smem constant byte address 0x4 - core index']
  #allocation1 [shape = 'u32[72,128]{1,0:T(1,128)}', space=vmem, size = 0x9000, scoped, tag = 'internal scratch']
  %s0 = inlined_call_operand.hbm [shape: f32[4,128], index: 0, kind: input, shape index: {}]
  %s1 = inlined_call_operand.hbm [shape: f32[4,128], index: 1, kind: output, shape index: {}]
  %s2 = sld [smem:[#allocation0]]
  $region18: #{tpu_custom_call.1} parent=0
    _
  %s4 = ssub.s32 1, %s2
  %s5 = scalar_select 0, %s4, %s2
  $region1: #{tpu_custom_call.1} parent=0
    #allocation2 [shape = 'u8[2048]{0}', space=vmem, size = 0x800, scoped, tag = 'input window, operand 0, single buffered']
    #allocation3 [shape = 's32[1]{0}', space=sflag, size = 0x4, scoped, tag = 'scoped memory for tpu_custom_call.1']
    #allocation4 [shape = 's32[1]{0}', space=sflag, size = 0x4, scoped, tag = 'scoped memory for tpu_custom_call.1']
    #allocation5 [shape = 'u8[2048]{0}', space=vmem, size = 0x800, scoped, tag = 'output window, operand 0, single buffered']
    %6 = vsyncpa [#allocation3], 0
    %7 = vsyncpa [#allocation4], 0
    // Predicated region
    $region2: #{tpu_custom_call.1} parent=1 // pred_check
      _
    $region3: #{tpu_custom_call.1} parent=1 // pred_check_branch
      %9 = sbr.rel (0) target = $region5
    $region4: #{tpu_custom_call.1} parent=1 // pred_region
      %11 = vsyncadd [#allocation3], 0
      %s13 = sshll.u32 %s0, 4
      %s14 = int_to_ptr.hbm [resolvable:$true] %s13
      %s15 = sshll.u32 [#allocation2], 4
      %s16 = int_to_ptr.vmem [resolvable:$true] %s15
      %18 = dma.hbm_to_vmem [thread:$0]  %s14, 64, %s16, [#allocation3]
    $region5: #{tpu_custom_call.1} parent=1 // pred_fallthru
      _
    // Predicated region
    $region6: #{tpu_custom_call.1} parent=1 // pred_check
      _
    $region7: #{tpu_custom_call.1} parent=1 // pred_check_branch
      %20 = sbr.rel (0) target = $region9
    $region8: #{tpu_custom_call.1} parent=1 // pred_region
      %22 = dma.done [#allocation3], 64
    $region9: #{tpu_custom_call.1} parent=1 // pred_fallthru
      _
    %v23 = vld [vmem:[#allocation2] sm:$0xf]
    %v24 = vmul.f32 %v23, 0.0
    %25 = vst [vmem:[#allocation5] sm:$0xf] %v24
    // Predicated region
    $region10: #{tpu_custom_call.1} parent=1 // pred_check
      _
    $region11: #{tpu_custom_call.1} parent=1 // pred_check_branch
      %27 = sbr.rel (0) target = $region13
    $region12: #{tpu_custom_call.1} parent=1 // pred_region
      %29 = vsyncadd [#allocation4], 0
      %s31 = sshll.u32 [#allocation5], 4
      %s32 = int_to_ptr.vmem [resolvable:$true] %s31
      %s33 = sshll.u32 %s1, 4
      %s34 = int_to_ptr.hbm [resolvable:$true] %s33
      %36 = dma.vmem_to_hbm [thread:$0]  %s32, 64, %s34, [#allocation4]
    $region13: #{tpu_custom_call.1} parent=1 // pred_fallthru
      _
    // Predicated region
    $region14: #{tpu_custom_call.1} parent=1 // pred_check
      _
    $region15: #{tpu_custom_call.1} parent=1 // pred_check_branch
      %38 = sbr.rel (0) target = $region17
    $region16: #{tpu_custom_call.1} parent=1 // pred_region
      %40 = dma.done [#allocation4], 64
    $region17: #{tpu_custom_call.1} parent=1 // pred_fallthru
      _
    %41 = vsyncpa [#allocation3], 1
    %42 = vsyncpa [#allocation4], 1

</llo_original>
